<compile_context>
chip_gen: v5e
topology: v5e:2x2
jax: 0.10.0
libtpu: 0.0.40
codegen_flags: <defaults>
</compile_context>

<pallas_src>
import jax
import jax.numpy as jnp
from jax.experimental import pallas as pl
from jax.experimental.pallas import tpu as pltpu


_TARGET_BLOCK_BYTES = 4 * 1024 * 1024    # ~4 MiB blocks, dtype-independent
_VMEM_LIMIT_BYTES = 32 * 1024 * 1024     # in+out, double-buffered 4 MiB blocks
_MAX_COLS = 8192                         # widest lane-dense slab width searched


def _pact_kernel(alpha_ref, x_ref, o_ref):
    # alpha_ref: (1,) f32 in SMEM; x_ref / o_ref: (tr, cols) VMEM tiles.
    x = x_ref[...]
    alpha = alpha_ref[0].astype(x.dtype)
    zero = jnp.zeros((), dtype=x.dtype)
    o_ref[...] = jnp.minimum(jnp.maximum(x, zero), alpha)


def _clamp_jnp(x, alpha_f32):
    a = alpha_f32.astype(x.dtype)
    return jnp.minimum(jnp.maximum(x, jnp.zeros((), x.dtype)), a)


def _pact_bulk(flat_bulk, alpha_f32):
    """Clamp a 128-divisible 1-D slab with the Pallas kernel."""
    n = flat_bulk.shape[0]
    dtype = flat_bulk.dtype
    itemsize = jnp.dtype(dtype).itemsize

    # Widest lane-dense column count (multiple of 128) that divides n exactly.
    cols = 128
    for c in range(_MAX_COLS, 127, -128):
        if n % c == 0:
            cols = c
            break
    rows = n // cols
    x2d = flat_bulk.reshape(rows, cols)

    # Byte-based row tile; multiple of 8 (valid (8,128) block tiling).
    tr = (_TARGET_BLOCK_BYTES // itemsize) // cols
    tr = max(8, (tr // 8) * 8)
    if rows >= 16:
        # Force at least two grid steps so v7x's 2 TensorCores both get work.
        tr = min(tr, max(8, (rows // 2 // 8) * 8))
    if tr >= rows:
        tr = rows                         # single block == full array dims
    grid = (pl.cdiv(rows, tr),)

    alpha_smem = alpha_f32.reshape(1)

    out2d = pl.pallas_call(
        _pact_kernel,
        out_shape=jax.ShapeDtypeStruct((rows, cols), dtype),
        grid_spec=pltpu.PrefetchScalarGridSpec(
            num_scalar_prefetch=0,
            grid=grid,
            in_specs=[
                pl.BlockSpec(memory_space=pltpu.MemorySpace.SMEM),  # alpha
                pl.BlockSpec((tr, cols), lambda i: (i, 0)),         # x tile
            ],
            out_specs=pl.BlockSpec((tr, cols), lambda i: (i, 0)),
        ),
        compiler_params=pltpu.CompilerParams(
            dimension_semantics=("parallel",),
            vmem_limit_bytes=_VMEM_LIMIT_BYTES,
        ),
    )(alpha_smem, x2d)
    return out2d.reshape(-1)


@jax.jit
def pact_forward(x, alpha):
    """PACT forward: clamp(x, min=0) elementwise-min alpha.  Any shape/dtype."""
    orig_shape = x.shape
    n = x.size
    alpha_f32 = jnp.asarray(alpha, dtype=jnp.float32).reshape(())

    if n == 0:
        return x
    flat = x.reshape(-1)
    bulk_n = (n // 128) * 128
    if bulk_n == 0:
        # Fewer than 128 elements: not worth a kernel dispatch.
        return _clamp_jnp(flat, alpha_f32).reshape(orig_shape)

    if bulk_n == n:
        out_flat = _pact_bulk(flat, alpha_f32)
    else:
        # 128-aligned bulk through the kernel; <128-element tail in plain jnp.
        out_bulk = _pact_bulk(flat[:bulk_n], alpha_f32)
        out_tail = _clamp_jnp(flat[bulk_n:], alpha_f32)
        out_flat = jnp.concatenate([out_bulk, out_tail])
    return out_flat.reshape(orig_shape)


if __name__ == "__main__":
    key = jax.random.PRNGKey(0)

    # Deterministic parameter init matching PACT.__init__ (alpha = 10.0).
    alpha = jnp.float32(10.0)

    # Small NCHW activation consistent with a ResNet block input.
    x = jax.random.normal(key, (2, 4, 16, 16), dtype=jnp.float32) * 8.0
    out = jax.block_until_ready(pact_forward(x, alpha))
    ref = jnp.minimum(jnp.maximum(x, 0.0), alpha)
    assert out.shape == x.shape and out.dtype == x.dtype
    assert jnp.allclose(out, ref), "PACT kernel mismatch (f32 small)"

    # Larger activation: exercises the multi-block grid + masked edge block.
    x_big = jax.random.normal(jax.random.PRNGKey(1), (4, 64, 56, 56),
                              dtype=jnp.float32) * 8.0
    out_big = jax.block_until_ready(pact_forward(x_big, alpha))
    ref_big = jnp.minimum(jnp.maximum(x_big, 0.0), alpha)
    assert jnp.allclose(out_big, ref_big), "PACT kernel mismatch (f32 tiled)"

    # bf16 activations stay bf16 end to end (alpha cast in-kernel).
    x_bf16 = x.astype(jnp.bfloat16)
    out_bf16 = jax.block_until_ready(pact_forward(x_bf16, alpha))
    ref_bf16 = jnp.minimum(jnp.maximum(x_bf16, jnp.bfloat16(0.0)),
                           jnp.bfloat16(10.0))
    assert out_bf16.dtype == jnp.bfloat16
    assert jnp.allclose(out_bf16.astype(jnp.float32),
                        ref_bf16.astype(jnp.float32)), "PACT kernel mismatch (bf16)"

    # Non-128-divisible element count: kernel bulk + jnp tail path.
    x_odd = jax.random.normal(jax.random.PRNGKey(2), (3, 7, 13),
                              dtype=jnp.float32) * 8.0
    out_odd = jax.block_until_ready(pact_forward(x_odd, alpha))
    ref_odd = jnp.minimum(jnp.maximum(x_odd, 0.0), alpha)
    assert jnp.allclose(out_odd, ref_odd), "PACT kernel mismatch (odd size)"

    print("KERNEL_OK")
</pallas_src>

<mosaic_0001>
module attributes {stable_mosaic.version = 11 : i64} {
  func.func @_pact_kernel(%arg0: i32, %arg1: memref<1xf32, #tpu.memory_space<smem>>, %arg2: memref<1x2048xf32, #tpu.memory_space<vmem>>, %arg3: memref<1x2048xf32, #tpu.memory_space<vmem>>) attributes {dimension_semantics = [#tpu.dimension_semantics<parallel>], iteration_bounds = array<i64: 1>, scalar_prefetch = 0 : i64, scratch_operands = 0 : i64, tpu.core_type = #tpu.core_type<tc>, window_params = [{transform_indices = @transform_0, window_bounds = array<i64: 1>}, {transform_indices = @transform_1, window_bounds = array<i64: 1, 2048>}, {transform_indices = @transform_2, window_bounds = array<i64: 1, 2048>}]} {
    %c0 = arith.constant 0 : index
    %c0_0 = arith.constant 0 : index
    %0 = vector.load %arg2[%c0, %c0_0] : memref<1x2048xf32, #tpu.memory_space<vmem>>, vector<1x2048xf32>
    %c0_1 = arith.constant 0 : index
    %1 = memref.load %arg1[%c0_1] : memref<1xf32, #tpu.memory_space<smem>>
    %cst = arith.constant 0.000000e+00 : f32
    %2 = vector.broadcast %cst : f32 to vector<1x2048xf32>
    %3 = arith.maximumf %0, %2 : vector<1x2048xf32>
    %4 = vector.broadcast %1 : f32 to vector<1x2048xf32>
    %5 = arith.minimumf %3, %4 : vector<1x2048xf32>
    %c0_2 = arith.constant 0 : index
    %c0_3 = arith.constant 0 : index
    %6 = vector.load %arg3[%c0_2, %c0_3] : memref<1x2048xf32, #tpu.memory_space<vmem>>, vector<1x2048xf32>
    tpu.vector_store %arg3[%c0_2, %c0_3], %5 {strides = array<i32>} : memref<1x2048xf32, #tpu.memory_space<vmem>>, vector<1x2048xf32>,
    return
  }
  func.func @transform_0(%arg0: i32) -> i32 {
    %c0_i32 = arith.constant 0 : i32
    %c0_i32_0 = arith.constant 0 : i32
    return %c0_i32 : i32
  }
  func.func @transform_1(%arg0: i32) -> (i32, i32) {
    %c0_i32 = arith.constant 0 : i32
    %c0_i32_0 = arith.constant 0 : i32
    return %arg0, %c0_i32 : i32, i32
  }
  func.func @transform_2(%arg0: i32) -> (i32, i32) {
    %c0_i32 = arith.constant 0 : i32
    %c0_i32_0 = arith.constant 0 : i32
    return %arg0, %c0_i32 : i32, i32
  }
}

</mosaic_0001>

<llo_original>
// kernel: pact_forward.1
$region0: #{pact_forward.1}
  #allocation0 [shape = 'u32[]', space=smem, size = 0x4, offset = 0x4, fixed_abs, tag = 'smem constant byte address 0x4 - core index']
  #allocation1 [shape = 'u32[72,128]{1,0:T(1,128)}', space=vmem, size = 0x9000, scoped, tag = 'internal scratch']
  #allocation2 [shape = 'f32[1]{0:T(128)S(6)}', space=smem, size = 0x200, scoped, tag = 'scoped memory for pact_forward.1']
  %s0 = inlined_call_operand.<no memory space> [shape: f32[1], index: 0, kind: input, shape index: {}]
  %s1 = inlined_call_operand.vmem [shape: f32[1,2048], index: 1, kind: input, shape index: {}]
  %s2 = inlined_call_operand.vmem [shape: f32[1,2048], index: 2, kind: output, shape index: {}]
  %s3 = sld [smem:[#allocation0]]
  $region18: #{pact_forward.1} parent=0
    _
  %s5 = ssub.s32 1, %s3
  %s6 = scalar_select 0, %s5, %s3
  %7 = sst [smem:[#allocation2]] %s0
  // Predicated region
  $region2: #{pact_forward.1} parent=0 // pred_check
    _
  $region3: #{pact_forward.1} parent=0 // pred_check_branch
    %9 = sbr.rel (0) target = $region5
  $region4: #{pact_forward.1} parent=0 // pred_region
    _
  $region5: #{pact_forward.1} parent=0 // pred_fallthru
    _
  // Predicated region
  $region6: #{pact_forward.1} parent=0 // pred_check
    _
  $region7: #{pact_forward.1} parent=0 // pred_check_branch
    %11 = sbr.rel (0) target = $region9
  $region8: #{pact_forward.1} parent=0 // pred_region
    _
  $region9: #{pact_forward.1} parent=0 // pred_fallthru
    _
  %v12 = vld [vmem:[%s1] sm:$0xff]
  %v13 = vld [vmem:[%s1 + $0x8] sm:$0xff]
  %s14 = sld [smem:[#allocation2]]
  %v15 = vmax.f32 %v12, 0.0
  %v16 = vmax.f32 %v13, 0.0
  %v17 = vstv %s14
  %v18 = vmin.f32 %v15, %v17
  %v19 = vmin.f32 %v16, %v17
  %20 = vst [vmem:[%s2] sm:$0xff] %v18
  %21 = vst [vmem:[%s2 + $0x8] sm:$0xff] %v19
  // Predicated region
  $region10: #{pact_forward.1} parent=0 // pred_check
    _
  $region11: #{pact_forward.1} parent=0 // pred_check_branch
    %23 = sbr.rel (0) target = $region13
  $region12: #{pact_forward.1} parent=0 // pred_region
    _
  $region13: #{pact_forward.1} parent=0 // pred_fallthru
    _
  // Predicated region
  $region14: #{pact_forward.1} parent=0 // pred_check
    _
  $region15: #{pact_forward.1} parent=0 // pred_check_branch
    %25 = sbr.rel (0) target = $region17
  $region16: #{pact_forward.1} parent=0 // pred_region
    _
  $region17: #{pact_forward.1} parent=0 // pred_fallthru
    _

</llo_original>
